<compile_context>
chip_gen: v7x
topology: tpu7x:2x2x1
jax: 0.10.0
libtpu: 0.0.40
codegen_flags: <defaults>
</compile_context>

<pallas_src>
import functools

import jax
import jax.numpy as jnp
from jax.experimental import pallas as pl
from jax.experimental.pallas import tpu as pltpu


def _round_up(x, m):
    return ((x + m - 1) // m) * m


def _device_kind():
    try:
        return jax.devices()[0].device_kind.lower()
    except Exception:
        return ""


def _kld_kernel(lv_ref, mu_ref, out_ref, acc_ref, *,
                n_rows, ragged, scale, bf16_exp):
    """Partial KLD over lane-dense (TR, W) tiles.

    lv_ref / mu_ref : (TR, W) VMEM tiles of the flattened inputs
    out_ref         : (1, 1) SMEM scalar -- this core's normalized partial sum
    acc_ref         : (8, W) f32 VMEM accumulator, resident across the inner
                      reduction grid axis; reset at i==0, reduced at last i.
    """
    i = pl.program_id(1)
    nt = pl.num_programs(1)

    @pl.when(i == 0)
    def _():
        acc_ref[...] = jnp.zeros_like(acc_ref)

    lv = lv_ref[...].astype(jnp.float32)
    mu = mu_ref[...].astype(jnp.float32)
    if bf16_exp:
        # bf16 EUP path (v6e/v7x only): ~2x exp throughput; accumulate in f32.
        e = jnp.exp(lv_ref[...]).astype(jnp.float32)
    else:
        e = jnp.exp(lv)
    term = 1.0 + lv - mu * mu - e                    # VPU + EUP elementwise

    if ragged:  # static: only emitted when the grid sweeps past the last row
        c = pl.program_id(0)
        tr, w = term.shape
        row0 = (c * nt + i) * tr
        row = jax.lax.broadcasted_iota(jnp.int32, (tr, w), 0) + row0
        term = jnp.where(row < n_rows, term, 0.0)

    # Fold TR rows down to 8 sublanes with pure vreg-wise adds (no XLU), then a
    # single cheap (8, W) += per step instead of a full-tile accumulator RMW.
    tr, w = term.shape
    acc_ref[...] += term.reshape(tr // 8, 8, w).sum(axis=0)

    @pl.when(i == nt - 1)
    def _():
        # One small XLU reduce per core; -0.5 and 1/(B*D) folded into `scale`.
        out_ref[0, 0] = jnp.sum(acc_ref[...]) * scale


@jax.jit
def gaussian_kld_loss(logvar, mu):
    assert logvar.shape == mu.shape and logvar.ndim == 2
    B, D = logvar.shape
    N = B * D
    dtype = logvar.dtype
    itemsize = jnp.dtype(dtype).itemsize
    pack = 8 if itemsize >= 4 else (16 if itemsize == 2 else 32)

    kind = _device_kind()
    is_v7 = "v7" in kind
    bf16_exp = (dtype == jnp.bfloat16) and (("v6" in kind) or ("v7" in kind))

    # ---- layout: lane-dense (rows, W) view, avoiding copies when possible --
    W = D if (D % 128 == 0) else 512
    rows = pl.cdiv(N, W)
    pad_free = (N % W == 0) and (rows >= pack)   # pure reshape/view, no pad

    # ---- tiling: ~2 MiB per input block, (pack,128)-aligned -----------------
    cap_tr = max(pack, ((2 * 1024 * 1024) // (W * itemsize)) // pack * pack)
    if pad_free:
        cap = max(pack, min(cap_tr, (rows // pack) * pack))   # keep TR <= rows
    else:
        cap = cap_tr

    # Two-TC split only on v7x and only when each core gets full-size tiles.
    NC = 2 if (is_v7 and rows >= 2 * cap) else 1
    if rows <= NC * cap:
        NT = 1
        TR = min(cap, _round_up(pl.cdiv(rows, NC), pack))
    else:
        TR = cap
        NT = pl.cdiv(rows, NC * TR)
    rows_cov = NC * NT * TR                      # rows swept by grid (>= rows)

    if pad_free:
        lv2 = logvar.reshape(rows, W)
        mu2 = mu.reshape(rows, W)
        arr_rows = rows
        ragged = rows_cov != rows                # mask only the ragged tail
    else:
        # Truly ragged flattened size: zero-pad.  Padded zeros contribute
        # 1 + 0 - 0 - exp(0) = 0 exactly, so no in-kernel mask is needed.
        pad = rows_cov * W - N

        def to_blocks(x):
            flat = x.reshape(-1)
            if pad:
                flat = jnp.pad(flat, (0, pad))
            return flat.reshape(rows_cov, W)

        lv2, mu2 = to_blocks(logvar), to_blocks(mu)
        arr_rows = rows_cov
        ragged = False

    # Clamp block indices so no block starts fully past the array; a clamped
    # (duplicate) block contributes 0 because the ragged mask uses the
    # unclamped row offset.
    last_block = pl.cdiv(arr_rows, TR) - 1
    idx_map = lambda c, i: (jnp.minimum(c * NT + i, last_block), 0)

    kernel = functools.partial(
        _kld_kernel,
        n_rows=rows,
        ragged=ragged,
        scale=-0.5 / (B * D),        # fold -0.5 and the /D /B normalization
        bf16_exp=bf16_exp,
    )

    if NC == 2:
        # TODO(synk): profile on real v7x that CORE_PARALLEL engages both TCs.
        dim_sem = (pltpu.CORE_PARALLEL, pltpu.ARBITRARY)
    else:
        dim_sem = ("arbitrary", "arbitrary")

    partials = pl.pallas_call(
        kernel,
        out_shape=jax.ShapeDtypeStruct((NC, 1), jnp.float32),
        grid_spec=pltpu.PrefetchScalarGridSpec(
            num_scalar_prefetch=0,
            grid=(NC, NT),
            in_specs=[
                pl.BlockSpec((TR, W), idx_map),
                pl.BlockSpec((TR, W), idx_map),
            ],
            out_specs=pl.BlockSpec(
                (1, 1), lambda c, i: (c, 0), memory_space=pltpu.SMEM
            ),
            scratch_shapes=[pltpu.VMEM((8, W), jnp.float32)],
        ),
        compiler_params=pltpu.CompilerParams(
            dimension_semantics=dim_sem,
            vmem_limit_bytes=32 * 1024 * 1024,
        ),
    )(lv2, mu2)

    # Each per-core partial is already normalized; their sum is the loss.
    return jnp.sum(partials)


if __name__ == "__main__":
    key = jax.random.PRNGKey(0)
    k1, k2 = jax.random.split(key)

    def ref_kld(lv, m):
        lv32 = lv.astype(jnp.float32)
        m32 = m.astype(jnp.float32)
        b, d = lv.shape
        return -0.5 * jnp.sum(1.0 + lv32 - m32 ** 2 - jnp.exp(lv32)) / d / b

    # (batch, latent_dim) -- same layout the PyTorch module expects.
    B, D = 16, 128
    logvar = jax.random.normal(k1, (B, D), dtype=jnp.float32) * 0.5
    mu = jax.random.normal(k2, (B, D), dtype=jnp.float32)
    out = jax.block_until_ready(gaussian_kld_loss(logvar, mu))
    ref = ref_kld(logvar, mu)
    assert jnp.allclose(out, ref, rtol=1e-5, atol=1e-6), (out, ref)

    # Ragged D -> flatten + zero-pad path (no in-kernel mask needed).
    lv2 = jax.random.normal(k1, (5, 33), dtype=jnp.float32) * 0.5
    mu2 = jax.random.normal(k2, (5, 33), dtype=jnp.float32)
    out2 = jax.block_until_ready(gaussian_kld_loss(lv2, mu2))
    ref2 = ref_kld(lv2, mu2)
    assert jnp.allclose(out2, ref2, rtol=1e-5, atol=1e-6), (out2, ref2)

    # D % 128 == 0 but row count not tile-aligned -> pad-free path with the
    # in-kernel ragged row mask (no jnp.pad copy of the inputs).
    lv3 = jax.random.normal(k1, (10, 128), dtype=jnp.float32) * 0.5
    mu3 = jax.random.normal(k2, (10, 128), dtype=jnp.float32)
    out3 = jax.block_until_ready(gaussian_kld_loss(lv3, mu3))
    ref3 = ref_kld(lv3, mu3)
    assert jnp.allclose(out3, ref3, rtol=1e-5, atol=1e-6), (out3, ref3)

    print("KERNEL_OK")
</pallas_src>

<mosaic_0001>
module attributes {stable_mosaic.version = 11 : i64} {
  func.func @_kld_kernel(%arg0: i32, %arg1: i32, %arg2: memref<16x128xf32, #tpu.memory_space<vmem>>, %arg3: memref<16x128xf32, #tpu.memory_space<vmem>>, %arg4: memref<1x1xf32, #tpu.memory_space<smem>>, %arg5: memref<8x128xf32, #tpu.memory_space<vmem>>) attributes {dimension_semantics = [#tpu.dimension_semantics<arbitrary>, #tpu.dimension_semantics<arbitrary>], iteration_bounds = array<i64: 1, 1>, scalar_prefetch = 0 : i64, scratch_operands = 1 : i64, tpu.core_type = #tpu.core_type<tc>, window_params = [{transform_indices = @transform_0, window_bounds = array<i64: 16, 128>}, {transform_indices = @transform_1, window_bounds = array<i64: 16, 128>}, {transform_indices = @transform_2, window_bounds = array<i64: 1, 1>}]} {
    %c0_i32 = arith.constant 0 : i32
    %0 = arith.cmpi eq, %arg1, %c0_i32 : i32
    %1 = arith.extui %0 : i1 to i32
    %c0_i32_0 = arith.constant 0 : i32
    %2 = arith.cmpi ne, %1, %c0_i32_0 : i32
    scf.if %2 {
      %cst_11 = arith.constant 0.000000e+00 : f32
      %19 = vector.broadcast %cst_11 : f32 to vector<8x128xf32>
      %c0_12 = arith.constant 0 : index
      %c0_13 = arith.constant 0 : index
      %20 = vector.load %arg5[%c0_12, %c0_13] : memref<8x128xf32, #tpu.memory_space<vmem>>, vector<8x128xf32>
      tpu.vector_store %arg5[%c0_12, %c0_13], %19 {strides = array<i32>} : memref<8x128xf32, #tpu.memory_space<vmem>>, vector<8x128xf32>,
    } else {
    }
    %c0 = arith.constant 0 : index
    %c0_1 = arith.constant 0 : index
    %3 = vector.load %arg2[%c0, %c0_1] : memref<16x128xf32, #tpu.memory_space<vmem>>, vector<16x128xf32>
    %c0_2 = arith.constant 0 : index
    %c0_3 = arith.constant 0 : index
    %4 = vector.load %arg3[%c0_2, %c0_3] : memref<16x128xf32, #tpu.memory_space<vmem>>, vector<16x128xf32>
    %5 = math.exp %3 : vector<16x128xf32>
    %cst = arith.constant 1.000000e+00 : f32
    %6 = vector.broadcast %cst : f32 to vector<16x128xf32>
    %7 = arith.addf %6, %3 : vector<16x128xf32>
    %8 = arith.mulf %4, %4 : vector<16x128xf32>
    %9 = arith.subf %7, %8 : vector<16x128xf32>
    %10 = arith.subf %9, %5 : vector<16x128xf32>
    %c0_4 = arith.constant 0 : index
    %c0_5 = arith.constant 0 : index
    %11 = vector.load %arg5[%c0_4, %c0_5] : memref<8x128xf32, #tpu.memory_space<vmem>>, vector<8x128xf32>
    %12 = vector.shape_cast %10 : vector<16x128xf32> to vector<2x8x128xf32>
    %cst_6 = arith.constant dense<0.000000e+00> : vector<8x128xf32>
    %13 = vector.multi_reduction <add>, %12, %cst_6 [0] : vector<2x8x128xf32> to vector<8x128xf32>
    %14 = arith.addf %11, %13 : vector<8x128xf32>
    %c0_7 = arith.constant 0 : index
    %c0_8 = arith.constant 0 : index
    %15 = vector.load %arg5[%c0_7, %c0_8] : memref<8x128xf32, #tpu.memory_space<vmem>>, vector<8x128xf32>
    tpu.vector_store %arg5[%c0_7, %c0_8], %14 {strides = array<i32>} : memref<8x128xf32, #tpu.memory_space<vmem>>, vector<8x128xf32>,
    %c0_i32_9 = arith.constant 0 : i32
    %16 = arith.cmpi eq, %arg1, %c0_i32_9 : i32
    %17 = arith.extui %16 : i1 to i32
    %c0_i32_10 = arith.constant 0 : i32
    %18 = arith.cmpi ne, %17, %c0_i32_10 : i32
    scf.if %18 {
      %c0_11 = arith.constant 0 : index
      %c0_12 = arith.constant 0 : index
      %19 = vector.load %arg5[%c0_11, %c0_12] : memref<8x128xf32, #tpu.memory_space<vmem>>, vector<8x128xf32>
      %20 = vector.shape_cast %19 : vector<8x128xf32> to vector<1x8x128xf32>
      %cst_13 = arith.constant dense<0.000000e+00> : vector<1xf32>
      %21 = vector.multi_reduction <add>, %20, %cst_13 [1, 2] : vector<1x8x128xf32> to vector<1xf32>
      %22 = vector.shape_cast %21 : vector<1xf32> to vector<1x1x1xf32>
      %23 = vector.extract %22[0, 0, 0] : f32 from vector<1x1x1xf32>
      %cst_14 = arith.constant -2.44140625E-4 : f32
      %24 = arith.mulf %23, %cst_14 : f32
      %c0_15 = arith.constant 0 : index
      %c0_16 = arith.constant 0 : index
      %25 = memref.load %arg4[%c0_15, %c0_16] : memref<1x1xf32, #tpu.memory_space<smem>>
      memref.store %24, %arg4[%c0_15, %c0_16] : memref<1x1xf32, #tpu.memory_space<smem>>
    } else {
    }
    return
  }
  func.func @transform_0(%arg0: i32, %arg1: i32) -> (i32, i32) {
    %c1_i32 = arith.constant 1 : i32
    %0 = arith.muli %arg0, %c1_i32 : i32
    %1 = arith.addi %0, %arg1 : i32
    %c0_i32 = arith.constant 0 : i32
    %2 = arith.minsi %1, %c0_i32 : i32
    %c0_i32_0 = arith.constant 0 : i32
    %c0_i32_1 = arith.constant 0 : i32
    return %2, %c0_i32_0 : i32, i32
  }
  func.func @transform_1(%arg0: i32, %arg1: i32) -> (i32, i32) {
    %c1_i32 = arith.constant 1 : i32
    %0 = arith.muli %arg0, %c1_i32 : i32
    %1 = arith.addi %0, %arg1 : i32
    %c0_i32 = arith.constant 0 : i32
    %2 = arith.minsi %1, %c0_i32 : i32
    %c0_i32_0 = arith.constant 0 : i32
    %c0_i32_1 = arith.constant 0 : i32
    return %2, %c0_i32_0 : i32, i32
  }
  func.func @transform_2(%arg0: i32, %arg1: i32) -> (i32, i32) {
    %c0_i32 = arith.constant 0 : i32
    %c0_i32_0 = arith.constant 0 : i32
    return %arg0, %c0_i32 : i32, i32
  }
}

</mosaic_0001>

<llo_original>
// kernel: gaussian_kld_loss.1
$region0: #{gaussian_kld_loss.1}
  #allocation0 [shape = 'u32[]', space=smem, size = 0x4, offset = 0x4, fixed_abs, tag = 'smem constant byte address 0x4 - core index']
  #allocation1 [shape = 'u32[144,128]{1,0:T(1,128)}', space=vmem, size = 0x12000, scoped, tag = 'internal scratch']
  #allocation2 [shape = 'f32[8,128]{1,0:T(8,128)}', space=vmem, size = 0x1000, scoped, tag = 'scratch operand']
  %s0 = inlined_call_operand.hbm [shape: f32[16,128], index: 0, kind: input, shape index: {}]
  %s1 = inlined_call_operand.hbm [shape: f32[16,128], index: 1, kind: input, shape index: {}]
  %s2 = inlined_call_operand.hbm [shape: f32[1,1], index: 2, kind: output, shape index: {}]
  %s3 = sld [smem:[#allocation0]]
  $region34: #{gaussian_kld_loss.1} parent=0
    _
  %s5 = ssub.s32 1, %s3
  %s6 = scalar_select 0, %s5, %s3
  $region1: #{gaussian_kld_loss.1} parent=0
    #allocation3 [shape = 'u8[8192]{0}', space=vmem, size = 0x2000, scoped, tag = 'input window, operand 0, single buffered']
    #allocation4 [shape = 's32[1]{0}', space=sflag, size = 0x4, scoped, tag = 'scoped memory for gaussian_kld_loss.1']
    #allocation5 [shape = 's32[1]{0}', space=sflag, size = 0x4, scoped, tag = 'scoped memory for gaussian_kld_loss.1']
    #allocation6 [shape = 'u8[8192]{0}', space=vmem, size = 0x2000, scoped, tag = 'input window, operand 1, single buffered']
    #allocation7 [shape = 's32[1]{0}', space=sflag, size = 0x4, scoped, tag = 'scoped memory for gaussian_kld_loss.1']
    #allocation8 [shape = 'u8[512]{0}', space=smem, size = 0x200, scoped, tag = 'output window, operand 0, single buffered']
    %7 = vsyncpa [#allocation4], 0
    %8 = vsyncpa [#allocation7], 0
    %9 = vsyncpa [#allocation5], 0
    // Predicated region
    $region2: #{gaussian_kld_loss.1} parent=1 // pred_check
      _
    $region3: #{gaussian_kld_loss.1} parent=1 // pred_check_branch
      %11 = sbr.rel (0) target = $region5
    $region4: #{gaussian_kld_loss.1} parent=1 // pred_region
      %s12 = sadd.s32 0, 0
      %p13 = scmp.lt.s32.totalorder %s12, 0
      %s14 = scalar_select %p13, %s12, 0
      %s15 = smul.u32 2, %s14
      %s17 = ssub.s32 256, 256
      %18 = vsyncadd [#allocation4], %s17
      %s19 = smul.addr %s15, 128
      %s20 = scalar_lea.hbm %s0, %s19
      %s21 = sshll.u32 [#allocation3], 4
      %s22 = int_to_ptr.vmem [resolvable:$true] %s21
      %27 = dma.hbm_to_vmem [thread:$0]  %s20, 256, %s22, [#allocation4], 128, 128, 8
    $region5: #{gaussian_kld_loss.1} parent=1 // pred_fallthru
      _
    // Predicated region
    $region6: #{gaussian_kld_loss.1} parent=1 // pred_check
      _
    $region7: #{gaussian_kld_loss.1} parent=1 // pred_check_branch
      %29 = sbr.rel (0) target = $region9
    $region8: #{gaussian_kld_loss.1} parent=1 // pred_region
      %s30 = sadd.s32 0, 0
      %p31 = scmp.lt.s32.totalorder %s30, 0
      %s32 = scalar_select %p31, %s30, 0
      %s33 = smul.u32 2, %s32
      %s35 = ssub.s32 256, 256
      %36 = vsyncadd [#allocation7], %s35
      %s37 = smul.addr %s33, 128
      %s38 = scalar_lea.hbm %s1, %s37
      %s39 = sshll.u32 [#allocation6], 4
      %s40 = int_to_ptr.vmem [resolvable:$true] %s39
      %45 = dma.hbm_to_vmem [thread:$0]  %s38, 256, %s40, [#allocation7], 128, 128, 8
    $region9: #{gaussian_kld_loss.1} parent=1 // pred_fallthru
      _
    // Predicated region
    $region10: #{gaussian_kld_loss.1} parent=1 // pred_check
      _
    $region11: #{gaussian_kld_loss.1} parent=1 // pred_check_branch
      %47 = sbr.rel (0) target = $region13
    $region12: #{gaussian_kld_loss.1} parent=1 // pred_region
      %48 = dma.done [#allocation4], 256
    $region13: #{gaussian_kld_loss.1} parent=1 // pred_fallthru
      _
    // Predicated region
    $region14: #{gaussian_kld_loss.1} parent=1 // pred_check
      _
    $region15: #{gaussian_kld_loss.1} parent=1 // pred_check_branch
      %50 = sbr.rel (0) target = $region17
    $region16: #{gaussian_kld_loss.1} parent=1 // pred_region
      %51 = dma.done [#allocation7], 256
    $region17: #{gaussian_kld_loss.1} parent=1 // pred_fallthru
      _
    %s52 = sadd.s32 0, 0
    %p53 = scmp.lt.s32.totalorder %s52, 0
    %s54 = scalar_select %p53, %s52, 0
    %s55 = smul.u32 2, %s54
    %s56 = sadd.s32 0, 0
    %p57 = scmp.lt.s32.totalorder %s56, 0
    %s58 = scalar_select %p57, %s56, 0
    %s59 = smul.u32 2, %s58
    %p60 = scmp.eq.s32.totalorder 0, 0
    // Predicated region
    $region18: #{gaussian_kld_loss.1} parent=1 // pred_check
      %p61 = pneg %p60
    $region19: #{gaussian_kld_loss.1} parent=1 // pred_check_branch
      %63 = sbr.rel (%p61) target = $region21
    $region20: #{gaussian_kld_loss.1} parent=1 // pred_region
      %64 = vst [vmem:[#allocation2] sm:$0xff] 0.0
    $region21: #{gaussian_kld_loss.1} parent=1 // pred_fallthru
      _
    %v65 = vld [vmem:[#allocation3] sm:$0xff]
    %v66 = vld [vmem:[#allocation3 + $0x8] sm:$0xff]
    %v67 = vld [vmem:[#allocation6] sm:$0xff]
    %v68 = vld [vmem:[#allocation6 + $0x8] sm:$0xff]
    %v69 = vmul.f32 %v65, 1.442695
    %v70 = vpow.pop %v69
    %v71 = vmul.f32 %v66, 1.442695
    %v72 = vpow.pop %v71
    %v73 = vadd.f32 %v65, 1.0
    %v74 = vadd.f32 %v66, 1.0
    %v75 = vmul.f32 %v67, %v67
    %v76 = vmul.f32 %v68, %v68
    %v77 = vsub.f32 %v73, %v75
    %v78 = vsub.f32 %v74, %v76
    %v79 = vsub.f32 %v77, %v70
    %v80 = vsub.f32 %v78, %v72
    %v81 = vld [vmem:[#allocation2] sm:$0xff]
    %v82 = vadd.f32 %v79, %v80
    %v83 = vadd.f32 %v81, %v82
    %84 = vst [vmem:[#allocation2] sm:$0xff] %v83
    // Predicated region
    $region22: #{gaussian_kld_loss.1} parent=1 // pred_check
      %p85 = pneg %p60
    $region23: #{gaussian_kld_loss.1} parent=1 // pred_check_branch
      %87 = sbr.rel (%p85) target = $region25
    $region24: #{gaussian_kld_loss.1} parent=1 // pred_region
      %v88 = vld [vmem:[#allocation2] sm:$0xff]
      %89 = vadd.xlane.f32.xlu0 %v88
      %v90 = vpop.xlane.xlu0 %89
      %v91 = vrot.slane %v90, 4
      %v92 = vadd.f32 %v90, %v91
      %v93 = vrot.slane %v92, 2
      %v94 = vadd.f32 %v92, %v93
      %v95 = vrot.slane %v94, 1
      %v96 = vadd.f32 %v94, %v95
      %s97 = vtos %v96
      %s98 = smul.f32 %s97, -0.00024414063
      %s99 = scalar_lea.smem [#allocation8], 0
      %100 = sst [smem:[%s99]] %s98
    $region25: #{gaussian_kld_loss.1} parent=1 // pred_fallthru
      _
    // Predicated region
    $region26: #{gaussian_kld_loss.1} parent=1 // pred_check
      _
    $region27: #{gaussian_kld_loss.1} parent=1 // pred_check_branch
      %102 = sbr.rel (0) target = $region29
    $region28: #{gaussian_kld_loss.1} parent=1 // pred_region
      %s104 = ssub.s32 16, 16
      %105 = vsyncadd [#allocation5], %s104
      %108 = dma.smem_to_hbm [#allocation8], 16, %s2, [#allocation5]
    $region29: #{gaussian_kld_loss.1} parent=1 // pred_fallthru
      _
    // Predicated region
    $region30: #{gaussian_kld_loss.1} parent=1 // pred_check
      _
    $region31: #{gaussian_kld_loss.1} parent=1 // pred_check_branch
      %110 = sbr.rel (0) target = $region33
    $region32: #{gaussian_kld_loss.1} parent=1 // pred_region
      %111 = dma.done [#allocation5], 16
    $region33: #{gaussian_kld_loss.1} parent=1 // pred_fallthru
      _
    %112 = sfence
    %113 = vsyncpa [#allocation4], 1
    %114 = vsyncpa [#allocation7], 1
    %115 = vsyncpa [#allocation5], 1

</llo_original>
